<compile_context>
chip_gen: v7x
topology: tpu7x:2x2x1
jax: 0.10.0
libtpu: 0.0.40
codegen_flags: <defaults>
</compile_context>

<pallas_src>
import jax
import jax.numpy as jnp
import numpy as np
from jax.experimental import pallas as pl
from jax.experimental.pallas import tpu as pltpu


def entity_encoder_kernel(ent_ref, facts_ref, table_ref, out_ref):
    # ent_ref:   (TB, 5, N)       f32  feature-major entities (entities on lanes)
    # facts_ref: (TB, 1, Mp)      f32  fact entity-index row, padded with -1
    # table_ref: (D_emb, T)       f32  transposed type-embedding table (grid-invariant)
    # out_ref:   (TB, emb_dim, N) f32  feature-major output
    ent = ent_ref[...]                                   # (TB, 5, N)
    facts = facts_ref[...]                               # (TB, 1, Mp)
    tbl = table_ref[...]                                 # (D_emb, T)
    tb, _, n = ent.shape
    d_emb, t_types = tbl.shape
    mp = facts.shape[-1]

    # ---- handcrafted features, all (TB, N) lane-dense rows --------------------------------
    col_dist = ent[:, 1, :]
    az = ent[:, 2, :]
    col3 = ent[:, 3, :]
    type_i = ent[:, 4:5, :].astype(jnp.int32)            # (TB, 1, N), integer-valued

    inv180 = 1.0 / 180.0
    north = jnp.abs(az) * inv180
    east = jnp.where(az >= -90.0,
                     jnp.abs(90.0 - az),
                     90.0 + jnp.abs(az + 180.0)) * inv180

    # per-entity fact counts: exact int compare, full-lane width, single lane-reduce
    facts_i = facts.astype(jnp.int32)                                        # (TB, 1, Mp)
    ent_idx = jax.lax.broadcasted_iota(jnp.int32, (1, n, mp), 1)             # entity id on sublanes
    match = (facts_i == ent_idx).astype(jnp.float32)                         # (TB, N, Mp)
    counts = jnp.sum(match, axis=-1)                                         # (TB, N)
    lane_idx = jax.lax.broadcasted_iota(jnp.int32, (tb, n), 1)
    counts = jnp.where(lane_idx == (n - 1), 0.0, counts)                     # last entity forced 0
    indicator = (counts > 0.0).astype(jnp.float32)

    handcrafted = jnp.stack([col_dist, north, east, col3, counts, indicator],
                            axis=1)                                          # (TB, 6, N)

    # ---- type embedding: T-way VPU select-accumulate (exact, no MXU) -----------------------
    emb = jnp.zeros((tb, d_emb, n), jnp.float32)
    for t in range(t_types):                              # T is small & static -> unrolled
        col = tbl[:, t:t + 1][None, :, :]                 # (1, D_emb, 1)
        emb = emb + jnp.where(type_i == t, col, 0.0)      # broadcast -> (TB, D_emb, N)

    # single full-block store, assembled along the sublane axis (no lane shuffles)
    out_ref[...] = jnp.concatenate([handcrafted, emb], axis=1).astype(out_ref.dtype)


def _pick_tb(batch, n, mp, emb_dim, vmem_budget_bytes=16 << 20):
    """Largest per-step batch tile: double-buffered blocks fit VMEM, grid keeps >= 2 steps."""
    bytes_per_batch = 4 * (5 * n + mp + emb_dim * n)
    cap = max(1, vmem_budget_bytes // (4 * bytes_per_batch))   # 2 bufs in + 2 bufs out
    tb = min(batch, cap)
    if batch >= 2:
        tb = min(tb, max(1, batch // 2))   # keep the parallel batch grid >= 2 for v7x megacore
    while batch % tb:
        tb -= 1
    return tb


def entity_encoder(entities, facts, type_table, emb_dim):
    """entities: (B, N, 5) f32, facts: (B, M, >=2), type_table: (T, emb_dim - 6)."""
    B, N, _ = entities.shape
    M = facts.shape[1]
    T, D_emb = type_table.shape
    assert D_emb == emb_dim - 6, "type embedding dim must be emb_dim - 6"

    # wrapper-side layout plumbing (cheap XLA transposes / pads)
    ent_t = jnp.transpose(entities.astype(jnp.float32), (0, 2, 1))           # (B, 5, N)
    Mp = 128 * pl.cdiv(M, 128)
    facts_col = facts[:, :, 1].astype(jnp.float32)                           # (B, M)
    facts_col = jnp.pad(facts_col, ((0, 0), (0, Mp - M)), constant_values=-1.0)
    facts_col = facts_col.reshape(B, 1, Mp)
    table_t = jnp.transpose(type_table.astype(jnp.float32), (1, 0))          # (D_emb, T)

    TB = _pick_tb(B, N, Mp, emb_dim)
    grid = (B // TB,)

    flops = B * N * (2 * T * D_emb + 16) + B * N * Mp
    bytes_accessed = 4 * (ent_t.size + facts_col.size + table_t.size + B * N * emb_dim)
    cost = pl.CostEstimate(flops=int(flops), transcendentals=0,
                           bytes_accessed=int(bytes_accessed))

    grid_spec = pltpu.PrefetchScalarGridSpec(
        num_scalar_prefetch=0,
        grid=grid,
        in_specs=[
            pl.BlockSpec((TB, 5, N), lambda b: (b, 0, 0)),
            pl.BlockSpec((TB, 1, Mp), lambda b: (b, 0, 0)),
            pl.BlockSpec((D_emb, T), lambda b: (0, 0)),     # grid-invariant table block
        ],
        out_specs=pl.BlockSpec((TB, emb_dim, N), lambda b: (b, 0, 0)),
    )
    out_t = pl.pallas_call(
        entity_encoder_kernel,
        out_shape=jax.ShapeDtypeStruct((B, emb_dim, N), jnp.float32),
        grid_spec=grid_spec,
        compiler_params=pltpu.CompilerParams(dimension_semantics=("parallel",)),
        cost_estimate=cost,
    )(ent_t, facts_col, table_t)
    return jnp.transpose(out_t, (0, 2, 1))                                   # (B, N, emb_dim)


def entity_encoder_reference(entities, facts, type_table, emb_dim):
    """Pure-JAX reference mirroring the PyTorch forward."""
    B, N, _ = entities.shape
    facts_col = facts[:, :, 1].astype(jnp.float32)
    az = entities[:, :, 2]
    north = jnp.abs(az) / 180.0
    east = jnp.where(az >= -90.0, jnp.abs(90.0 - az), 90.0 + jnp.abs(az + 180.0)) / 180.0
    idx = jnp.arange(N, dtype=jnp.float32)
    counts = jnp.sum(facts_col[:, None, :] == idx[None, :, None], axis=-1).astype(jnp.float32)
    counts = counts.at[:, N - 1].set(0.0)
    ind = (counts > 0).astype(jnp.float32)
    emb = type_table[entities[:, :, 4].astype(jnp.int32)]
    return jnp.concatenate(
        [entities[:, :, 1:2], north[..., None], east[..., None],
         entities[:, :, 3:4], counts[..., None], ind[..., None], emb], axis=-1)


if __name__ == "__main__":
    B, N, M = 2, 8, 16            # batch, entities per batch, facts per batch
    num_types = 7
    emb_dim = 32                  # 6 handcrafted + 26-dim type embedding
    d_emb = emb_dim - 6

    key = jax.random.PRNGKey(0)
    k1, k2, k3, k4, k5 = jax.random.split(key, 5)

    feat01 = jax.random.normal(k1, (B, N, 2), jnp.float32)                          # cols 0, 1
    azimuth = jax.random.uniform(k2, (B, N, 1), jnp.float32, -180.0, 180.0)         # col 2
    feat3 = jax.random.normal(k3, (B, N, 1), jnp.float32)                           # col 3
    type_ids = jax.random.randint(k4, (B, N, 1), 0, num_types).astype(jnp.float32)  # col 4
    entities = jnp.concatenate([feat01, azimuth, feat3, type_ids], axis=-1)         # (B, N, 5)

    fact_entity_ids = jax.random.randint(k5, (B, M, 1), 0, N).astype(jnp.float32)
    facts = jnp.concatenate(
        [jnp.zeros((B, M, 1), jnp.float32), fact_entity_ids], axis=-1)              # (B, M, 2)

    # deterministic synthetic type-embedding table (stand-in for nn.Embedding weights)
    type_table = jax.random.normal(jax.random.PRNGKey(42), (num_types, d_emb), jnp.float32)

    out = entity_encoder(entities, facts, type_table, emb_dim)
    out = jax.block_until_ready(out)

    ref = entity_encoder_reference(entities, facts, type_table, emb_dim)
    np.testing.assert_allclose(np.asarray(out), np.asarray(ref), rtol=1e-5, atol=1e-5)

    print("KERNEL_OK")
</pallas_src>

<mosaic_0001>
module attributes {stable_mosaic.version = 11 : i64} {
  func.func @entity_encoder_kernel(%arg0: i32, %arg1: memref<1x5x8xf32, #tpu.memory_space<vmem>>, %arg2: memref<1x1x128xf32, #tpu.memory_space<vmem>>, %arg3: memref<26x7xf32, #tpu.memory_space<vmem>>, %arg4: memref<1x32x8xf32, #tpu.memory_space<vmem>>) attributes {dimension_semantics = [#tpu.dimension_semantics<parallel>], iteration_bounds = array<i64: 2>, scalar_prefetch = 0 : i64, scratch_operands = 0 : i64, tpu.core_type = #tpu.core_type<tc>, window_params = [{transform_indices = @transform_0, window_bounds = array<i64: 1, 5, 8>}, {transform_indices = @transform_1, window_bounds = array<i64: 1, 1, 128>}, {pipeline_mode = #tpu.pipeline_mode<synchronous>, transform_indices = @transform_2, window_bounds = array<i64: 26, 7>}, {transform_indices = @transform_3, window_bounds = array<i64: 1, 32, 8>}]} {
    %c0 = arith.constant 0 : index
    %c0_0 = arith.constant 0 : index
    %c0_1 = arith.constant 0 : index
    %0 = vector.load %arg1[%c0, %c0_0, %c0_1] : memref<1x5x8xf32, #tpu.memory_space<vmem>>, vector<1x5x8xf32>
    %c0_2 = arith.constant 0 : index
    %c0_3 = arith.constant 0 : index
    %c0_4 = arith.constant 0 : index
    %1 = vector.load %arg2[%c0_2, %c0_3, %c0_4] : memref<1x1x128xf32, #tpu.memory_space<vmem>>, vector<1x1x128xf32>
    %c0_5 = arith.constant 0 : index
    %c0_6 = arith.constant 0 : index
    %2 = vector.load %arg3[%c0_5, %c0_6] : memref<26x7xf32, #tpu.memory_space<vmem>>, vector<26x7xf32>
    %3 = vector.extract_strided_slice %0 {offsets = [0, 1, 0], sizes = [1, 1, 8], strides = [1, 1, 1]} : vector<1x5x8xf32> to vector<1x1x8xf32>
    %4 = vector.shape_cast %3 : vector<1x1x8xf32> to vector<1x8xf32>
    %5 = vector.extract_strided_slice %0 {offsets = [0, 2, 0], sizes = [1, 1, 8], strides = [1, 1, 1]} : vector<1x5x8xf32> to vector<1x1x8xf32>
    %6 = vector.shape_cast %5 : vector<1x1x8xf32> to vector<1x8xf32>
    %7 = vector.extract_strided_slice %0 {offsets = [0, 3, 0], sizes = [1, 1, 8], strides = [1, 1, 1]} : vector<1x5x8xf32> to vector<1x1x8xf32>
    %8 = vector.shape_cast %7 : vector<1x1x8xf32> to vector<1x8xf32>
    %9 = vector.extract_strided_slice %0 {offsets = [0, 4, 0], sizes = [1, 1, 8], strides = [1, 1, 1]} : vector<1x5x8xf32> to vector<1x1x8xf32>
    %10 = arith.fptosi %9 : vector<1x1x8xf32> to vector<1x1x8xi32>
    %11 = math.absf %6 : vector<1x8xf32>
    %cst = arith.constant 0.00555555569 : f32
    %12 = vector.broadcast %cst : f32 to vector<1x8xf32>
    %13 = arith.mulf %11, %12 : vector<1x8xf32>
    %cst_7 = arith.constant -9.000000e+01 : f32
    %14 = vector.broadcast %cst_7 : f32 to vector<1x8xf32>
    %15 = arith.cmpf oge, %6, %14 : vector<1x8xf32>
    %cst_8 = arith.constant 9.000000e+01 : f32
    %16 = vector.broadcast %cst_8 : f32 to vector<1x8xf32>
    %17 = arith.subf %16, %6 : vector<1x8xf32>
    %18 = math.absf %17 : vector<1x8xf32>
    %cst_9 = arith.constant 1.800000e+02 : f32
    %19 = vector.broadcast %cst_9 : f32 to vector<1x8xf32>
    %20 = arith.addf %6, %19 : vector<1x8xf32>
    %21 = math.absf %20 : vector<1x8xf32>
    %cst_10 = arith.constant 9.000000e+01 : f32
    %22 = vector.broadcast %cst_10 : f32 to vector<1x8xf32>
    %23 = arith.addf %22, %21 : vector<1x8xf32>
    %24 = arith.select %15, %18, %23 : vector<1x8xi1>, vector<1x8xf32>
    %cst_11 = arith.constant 0.00555555569 : f32
    %25 = vector.broadcast %cst_11 : f32 to vector<1x8xf32>
    %26 = arith.mulf %24, %25 : vector<1x8xf32>
    %27 = arith.fptosi %1 : vector<1x1x128xf32> to vector<1x1x128xi32>
    %28 = tpu.iota {dimensions = array<i32: 1>} : vector<1x8x128xi32>
    %29 = vector.broadcast %27 : vector<1x1x128xi32> to vector<1x8x128xi32>
    %30 = arith.cmpi eq, %29, %28 : vector<1x8x128xi32>
    %31 = arith.extui %30 : vector<1x8x128xi1> to vector<1x8x128xi32>
    %32 = arith.sitofp %31 : vector<1x8x128xi32> to vector<1x8x128xf32>
    %cst_12 = arith.constant dense<0.000000e+00> : vector<1x8xf32>
    %33 = vector.multi_reduction <add>, %32, %cst_12 [2] : vector<1x8x128xf32> to vector<1x8xf32>
    %34 = tpu.iota {dimensions = array<i32: 1>} : vector<1x8xi32>
    %c7_i32 = arith.constant 7 : i32
    %35 = vector.broadcast %c7_i32 : i32 to vector<1x8xi32>
    %36 = arith.cmpi eq, %34, %35 : vector<1x8xi32>
    %cst_13 = arith.constant 0.000000e+00 : f32
    %37 = vector.broadcast %cst_13 : f32 to vector<1x8xf32>
    %38 = arith.select %36, %37, %33 : vector<1x8xi1>, vector<1x8xf32>
    %cst_14 = arith.constant 0.000000e+00 : f32
    %39 = vector.broadcast %cst_14 : f32 to vector<1x8xf32>
    %40 = arith.cmpf ogt, %38, %39 : vector<1x8xf32>
    %41 = arith.extui %40 : vector<1x8xi1> to vector<1x8xi32>
    %42 = arith.sitofp %41 : vector<1x8xi32> to vector<1x8xf32>
    %43 = vector.shape_cast %4 : vector<1x8xf32> to vector<1x1x8xf32>
    %44 = vector.shape_cast %13 : vector<1x8xf32> to vector<1x1x8xf32>
    %45 = vector.shape_cast %26 : vector<1x8xf32> to vector<1x1x8xf32>
    %46 = vector.shape_cast %8 : vector<1x8xf32> to vector<1x1x8xf32>
    %47 = vector.shape_cast %38 : vector<1x8xf32> to vector<1x1x8xf32>
    %48 = vector.shape_cast %42 : vector<1x8xf32> to vector<1x1x8xf32>
    %49 = tpu.concatenate %43, %44, %45, %46, %47, %48 in 1 : vector<1x1x8xf32>, vector<1x1x8xf32>, vector<1x1x8xf32>, vector<1x1x8xf32>, vector<1x1x8xf32>, vector<1x1x8xf32> -> vector<1x6x8xf32>
    %cst_15 = arith.constant 0.000000e+00 : f32
    %50 = vector.broadcast %cst_15 : f32 to vector<1x26x8xf32>
    %51 = vector.extract_strided_slice %2 {offsets = [0, 0], sizes = [26, 1], strides = [1, 1]} : vector<26x7xf32> to vector<26x1xf32>
    %52 = vector.shape_cast %51 : vector<26x1xf32> to vector<1x26x1xf32>
    %c0_i32 = arith.constant 0 : i32
    %53 = vector.broadcast %c0_i32 : i32 to vector<1x1x8xi32>
    %54 = arith.cmpi eq, %10, %53 : vector<1x1x8xi32>
    %cst_16 = arith.constant 0.000000e+00 : f32
    %55 = vector.shape_cast %54 : vector<1x1x8xi1> to vector<1x1x8xi1>
    %56 = vector.broadcast %55 : vector<1x1x8xi1> to vector<1x26x8xi1>
    %57 = vector.shape_cast %52 : vector<1x26x1xf32> to vector<1x26x1xf32>
    %58 = vector.broadcast %57 : vector<1x26x1xf32> to vector<1x26x8xf32>
    %59 = vector.broadcast %cst_16 : f32 to vector<1x26x8xf32>
    %60 = arith.select %56, %58, %59 : vector<1x26x8xi1>, vector<1x26x8xf32>
    %61 = arith.addf %50, %60 : vector<1x26x8xf32>
    %62 = vector.extract_strided_slice %2 {offsets = [0, 1], sizes = [26, 1], strides = [1, 1]} : vector<26x7xf32> to vector<26x1xf32>
    %63 = vector.shape_cast %62 : vector<26x1xf32> to vector<1x26x1xf32>
    %c1_i32 = arith.constant 1 : i32
    %64 = vector.broadcast %c1_i32 : i32 to vector<1x1x8xi32>
    %65 = arith.cmpi eq, %10, %64 : vector<1x1x8xi32>
    %cst_17 = arith.constant 0.000000e+00 : f32
    %66 = vector.shape_cast %65 : vector<1x1x8xi1> to vector<1x1x8xi1>
    %67 = vector.broadcast %66 : vector<1x1x8xi1> to vector<1x26x8xi1>
    %68 = vector.shape_cast %63 : vector<1x26x1xf32> to vector<1x26x1xf32>
    %69 = vector.broadcast %68 : vector<1x26x1xf32> to vector<1x26x8xf32>
    %70 = vector.broadcast %cst_17 : f32 to vector<1x26x8xf32>
    %71 = arith.select %67, %69, %70 : vector<1x26x8xi1>, vector<1x26x8xf32>
    %72 = arith.addf %61, %71 : vector<1x26x8xf32>
    %73 = vector.extract_strided_slice %2 {offsets = [0, 2], sizes = [26, 1], strides = [1, 1]} : vector<26x7xf32> to vector<26x1xf32>
    %74 = vector.shape_cast %73 : vector<26x1xf32> to vector<1x26x1xf32>
    %c2_i32 = arith.constant 2 : i32
    %75 = vector.broadcast %c2_i32 : i32 to vector<1x1x8xi32>
    %76 = arith.cmpi eq, %10, %75 : vector<1x1x8xi32>
    %cst_18 = arith.constant 0.000000e+00 : f32
    %77 = vector.shape_cast %76 : vector<1x1x8xi1> to vector<1x1x8xi1>
    %78 = vector.broadcast %77 : vector<1x1x8xi1> to vector<1x26x8xi1>
    %79 = vector.shape_cast %74 : vector<1x26x1xf32> to vector<1x26x1xf32>
    %80 = vector.broadcast %79 : vector<1x26x1xf32> to vector<1x26x8xf32>
    %81 = vector.broadcast %cst_18 : f32 to vector<1x26x8xf32>
    %82 = arith.select %78, %80, %81 : vector<1x26x8xi1>, vector<1x26x8xf32>
    %83 = arith.addf %72, %82 : vector<1x26x8xf32>
    %84 = vector.extract_strided_slice %2 {offsets = [0, 3], sizes = [26, 1], strides = [1, 1]} : vector<26x7xf32> to vector<26x1xf32>
    %85 = vector.shape_cast %84 : vector<26x1xf32> to vector<1x26x1xf32>
    %c3_i32 = arith.constant 3 : i32
    %86 = vector.broadcast %c3_i32 : i32 to vector<1x1x8xi32>
    %87 = arith.cmpi eq, %10, %86 : vector<1x1x8xi32>
    %cst_19 = arith.constant 0.000000e+00 : f32
    %88 = vector.shape_cast %87 : vector<1x1x8xi1> to vector<1x1x8xi1>
    %89 = vector.broadcast %88 : vector<1x1x8xi1> to vector<1x26x8xi1>
    %90 = vector.shape_cast %85 : vector<1x26x1xf32> to vector<1x26x1xf32>
    %91 = vector.broadcast %90 : vector<1x26x1xf32> to vector<1x26x8xf32>
    %92 = vector.broadcast %cst_19 : f32 to vector<1x26x8xf32>
    %93 = arith.select %89, %91, %92 : vector<1x26x8xi1>, vector<1x26x8xf32>
    %94 = arith.addf %83, %93 : vector<1x26x8xf32>
    %95 = vector.extract_strided_slice %2 {offsets = [0, 4], sizes = [26, 1], strides = [1, 1]} : vector<26x7xf32> to vector<26x1xf32>
    %96 = vector.shape_cast %95 : vector<26x1xf32> to vector<1x26x1xf32>
    %c4_i32 = arith.constant 4 : i32
    %97 = vector.broadcast %c4_i32 : i32 to vector<1x1x8xi32>
    %98 = arith.cmpi eq, %10, %97 : vector<1x1x8xi32>
    %cst_20 = arith.constant 0.000000e+00 : f32
    %99 = vector.shape_cast %98 : vector<1x1x8xi1> to vector<1x1x8xi1>
    %100 = vector.broadcast %99 : vector<1x1x8xi1> to vector<1x26x8xi1>
    %101 = vector.shape_cast %96 : vector<1x26x1xf32> to vector<1x26x1xf32>
    %102 = vector.broadcast %101 : vector<1x26x1xf32> to vector<1x26x8xf32>
    %103 = vector.broadcast %cst_20 : f32 to vector<1x26x8xf32>
    %104 = arith.select %100, %102, %103 : vector<1x26x8xi1>, vector<1x26x8xf32>
    %105 = arith.addf %94, %104 : vector<1x26x8xf32>
    %106 = vector.extract_strided_slice %2 {offsets = [0, 5], sizes = [26, 1], strides = [1, 1]} : vector<26x7xf32> to vector<26x1xf32>
    %107 = vector.shape_cast %106 : vector<26x1xf32> to vector<1x26x1xf32>
    %c5_i32 = arith.constant 5 : i32
    %108 = vector.broadcast %c5_i32 : i32 to vector<1x1x8xi32>
    %109 = arith.cmpi eq, %10, %108 : vector<1x1x8xi32>
    %cst_21 = arith.constant 0.000000e+00 : f32
    %110 = vector.shape_cast %109 : vector<1x1x8xi1> to vector<1x1x8xi1>
    %111 = vector.broadcast %110 : vector<1x1x8xi1> to vector<1x26x8xi1>
    %112 = vector.shape_cast %107 : vector<1x26x1xf32> to vector<1x26x1xf32>
    %113 = vector.broadcast %112 : vector<1x26x1xf32> to vector<1x26x8xf32>
    %114 = vector.broadcast %cst_21 : f32 to vector<1x26x8xf32>
    %115 = arith.select %111, %113, %114 : vector<1x26x8xi1>, vector<1x26x8xf32>
    %116 = arith.addf %105, %115 : vector<1x26x8xf32>
    %117 = vector.extract_strided_slice %2 {offsets = [0, 6], sizes = [26, 1], strides = [1, 1]} : vector<26x7xf32> to vector<26x1xf32>
    %118 = vector.shape_cast %117 : vector<26x1xf32> to vector<1x26x1xf32>
    %c6_i32 = arith.constant 6 : i32
    %119 = vector.broadcast %c6_i32 : i32 to vector<1x1x8xi32>
    %120 = arith.cmpi eq, %10, %119 : vector<1x1x8xi32>
    %cst_22 = arith.constant 0.000000e+00 : f32
    %121 = vector.shape_cast %120 : vector<1x1x8xi1> to vector<1x1x8xi1>
    %122 = vector.broadcast %121 : vector<1x1x8xi1> to vector<1x26x8xi1>
    %123 = vector.shape_cast %118 : vector<1x26x1xf32> to vector<1x26x1xf32>
    %124 = vector.broadcast %123 : vector<1x26x1xf32> to vector<1x26x8xf32>
    %125 = vector.broadcast %cst_22 : f32 to vector<1x26x8xf32>
    %126 = arith.select %122, %124, %125 : vector<1x26x8xi1>, vector<1x26x8xf32>
    %127 = arith.addf %116, %126 : vector<1x26x8xf32>
    %128 = tpu.concatenate %49, %127 in 1 : vector<1x6x8xf32>, vector<1x26x8xf32> -> vector<1x32x8xf32>
    %c0_23 = arith.constant 0 : index
    %c0_24 = arith.constant 0 : index
    %c0_25 = arith.constant 0 : index
    %129 = vector.load %arg4[%c0_23, %c0_24, %c0_25] : memref<1x32x8xf32, #tpu.memory_space<vmem>>, vector<1x32x8xf32>
    tpu.vector_store %arg4[%c0_23, %c0_24, %c0_25], %128 {strides = array<i32>} : memref<1x32x8xf32, #tpu.memory_space<vmem>>, vector<1x32x8xf32>,
    return
  }
  func.func @transform_0(%arg0: i32) -> (i32, i32, i32) {
    %c0_i32 = arith.constant 0 : i32
    %c0_i32_0 = arith.constant 0 : i32
    %c0_i32_1 = arith.constant 0 : i32
    return %arg0, %c0_i32, %c0_i32_0 : i32, i32, i32
  }
  func.func @transform_1(%arg0: i32) -> (i32, i32, i32) {
    %c0_i32 = arith.constant 0 : i32
    %c0_i32_0 = arith.constant 0 : i32
    %c0_i32_1 = arith.constant 0 : i32
    return %arg0, %c0_i32, %c0_i32_0 : i32, i32, i32
  }
  func.func @transform_2(%arg0: i32) -> (i32, i32) {
    %c0_i32 = arith.constant 0 : i32
    %c0_i32_0 = arith.constant 0 : i32
    %c0_i32_1 = arith.constant 0 : i32
    return %c0_i32, %c0_i32_0 : i32, i32
  }
  func.func @transform_3(%arg0: i32) -> (i32, i32, i32) {
    %c0_i32 = arith.constant 0 : i32
    %c0_i32_0 = arith.constant 0 : i32
    %c0_i32_1 = arith.constant 0 : i32
    return %arg0, %c0_i32, %c0_i32_0 : i32, i32, i32
  }
}

</mosaic_0001>

<llo_original>
// kernel: tpu_custom_call.1
$region0: #{tpu_custom_call.1}
  #allocation0 [shape = 'u32[]', space=smem, size = 0x4, offset = 0x4, fixed_abs, tag = 'smem constant byte address 0x4 - core index']
  #allocation1 [shape = 'u32[144,128]{1,0:T(1,128)}', space=vmem, size = 0x12000, scoped, tag = 'internal scratch']
  %s0 = inlined_call_operand.vmem [shape: f32[2,5,8], index: 0, kind: input, shape index: {}]
  %s1 = inlined_call_operand.vmem [shape: f32[2,1,128], index: 1, kind: input, shape index: {}]
  %s2 = inlined_call_operand.vmem [shape: f32[26,7], index: 2, kind: input, shape index: {}]
  %s3 = inlined_call_operand.vmem [shape: f32[2,32,8], index: 3, kind: output, shape index: {}]
  %s4 = sld [smem:[#allocation0]]
  $region45: #{tpu_custom_call.1} parent=0
    _
  %s6 = ssub.s32 1, %s4
  %s7 = scalar_select 0, %s6, %s4
  loop: start=0, step=1, limit=4
  $region2: #{tpu_custom_call.1} parent=0 // loop_pre_header
    _
  $region3: #{tpu_custom_call.1} parent=0 // loop_header
    %s9 = sphi 0, %s13
    %p10 = scmp.ge.s32.totalorder %s9, 4
    %s19 = sphi 0, %s21
    %s22 = sphi 0, %s19
    %s23 = sphi 0, %s22
    %s39 = sphi 0, %s23
    %s45 = sphi 0, %s47
    %s48 = sphi 0, %s45
    %s49 = sphi 0, %s48
    %s65 = sphi 0, %s49
    %s69 = sphi 0, %s69
    %s71 = sphi 0, %s69
    %s72 = sphi 0, %s71
    %s86 = sphi 0, %s72
    %s92 = sphi 0, %s94
    %s95 = sphi 0, %s92
    %s96 = sphi 0, %s95
    %s112 = sphi 0, %s96
  $region4: #{tpu_custom_call.1} parent=0 // loop_header_branch
    %12 = sbr.rel (%p10) target = $region8
  $region5: #{tpu_custom_call.1} parent=0 // loop_body
    %s14 = ssub.s32 %s9, 1
    %s15 = ssub.s32 %s9, 2
    %s16 = sadd.s32 %s9, 1
    %s17 = ssub.s32 %s9, %s16
    %p18 = scmp.eq.s32.totalorder %s17, 0
    %s20 = sadd.s32 %s19, 1
    %s21 = scalar_select %p18, %s19, %s20
    %p24 = pneg %p18
    %p25 = scmp.eq.s32.totalorder %s9, 1
    %p26 = por %p24, %p25
    %p27 = scmp.ne.s32.totalorder %s19, %s22
    %p28 = scmp.eq.s32.totalorder %s9, 0
    %p29 = por %p27, %p28
    %p30 = scmp.ne.s32.totalorder %s19, %s22
    %p31 = scmp.eq.s32.totalorder %s14, 1
    %p32 = por %p30, %p31
    %p33 = scmp.ne.s32.totalorder %s22, %s23
    %p34 = scmp.eq.s32.totalorder %s14, 0
    %p35 = por %p33, %p34
    %p36 = scmp.ne.s32.totalorder %s22, %s23
    %p37 = scmp.eq.s32.totalorder %s15, 1
    %p38 = por %p36, %p37
    %p40 = scmp.ne.s32.totalorder %s23, %s39
    %p41 = scmp.eq.s32.totalorder %s15, 0
    %p42 = por %p40, %p41
    %s43 = ssub.s32 %s9, %s16
    %p44 = scmp.eq.s32.totalorder %s43, 0
    %s46 = sadd.s32 %s45, 1
    %s47 = scalar_select %p44, %s45, %s46
    %p50 = pneg %p44
    %p51 = scmp.eq.s32.totalorder %s9, 1
    %p52 = por %p50, %p51
    %p53 = scmp.ne.s32.totalorder %s45, %s48
    %p54 = scmp.eq.s32.totalorder %s9, 0
    %p55 = por %p53, %p54
    %p56 = scmp.ne.s32.totalorder %s45, %s48
    %p57 = scmp.eq.s32.totalorder %s14, 1
    %p58 = por %p56, %p57
    %p59 = scmp.ne.s32.totalorder %s48, %s49
    %p60 = scmp.eq.s32.totalorder %s14, 0
    %p61 = por %p59, %p60
    %p62 = scmp.ne.s32.totalorder %s48, %s49
    %p63 = scmp.eq.s32.totalorder %s15, 1
    %p64 = por %p62, %p63
    %p66 = scmp.ne.s32.totalorder %s49, %s65
    %p67 = scmp.eq.s32.totalorder %s15, 0
    %p68 = por %p66, %p67
    %s70 = sadd.s32 %s69, 1
    %p73 = scmp.eq.s32.totalorder %s9, 1
    %p74 = scmp.ne.s32.totalorder %s69, %s71
    %p75 = scmp.eq.s32.totalorder %s9, 0
    %p76 = por %p74, %p75
    %p77 = scmp.ne.s32.totalorder %s69, %s71
    %p78 = scmp.eq.s32.totalorder %s14, 1
    %p79 = por %p77, %p78
    %p80 = scmp.ne.s32.totalorder %s71, %s72
    %p81 = scmp.eq.s32.totalorder %s14, 0
    %p82 = por %p80, %p81
    %p83 = scmp.ne.s32.totalorder %s71, %s72
    %p84 = scmp.eq.s32.totalorder %s15, 1
    %p85 = por %p83, %p84
    %p87 = scmp.ne.s32.totalorder %s72, %s86
    %p88 = scmp.eq.s32.totalorder %s15, 0
    %p89 = por %p87, %p88
    %s90 = ssub.s32 %s9, %s16
    %p91 = scmp.eq.s32.totalorder %s90, 0
    %s93 = sadd.s32 %s92, 1
    %s94 = scalar_select %p91, %s92, %s93
    %p97 = pneg %p91
    %p98 = scmp.eq.s32.totalorder %s9, 1
    %p99 = por %p97, %p98
    %p100 = scmp.ne.s32.totalorder %s92, %s95
    %p101 = scmp.eq.s32.totalorder %s9, 0
    %p102 = por %p100, %p101
    %p103 = scmp.ne.s32.totalorder %s92, %s95
    %p104 = scmp.eq.s32.totalorder %s14, 1
    %p105 = por %p103, %p104
    %p106 = scmp.ne.s32.totalorder %s95, %s96
    %p107 = scmp.eq.s32.totalorder %s14, 0
    %p108 = por %p106, %p107
    %p109 = scmp.ne.s32.totalorder %s95, %s96
    %p110 = scmp.eq.s32.totalorder %s15, 1
    %p111 = por %p109, %p110
    %p113 = scmp.ne.s32.totalorder %s96, %s112
    %p114 = scmp.eq.s32.totalorder %s15, 0
    %p115 = por %p113, %p114
    %p116 = scmp.le.s32.totalorder 1, %s9
    %p117 = scmp.lt.s32.totalorder %s9, 3
    %p118 = pnand %p116, %p117
    %p119 = pneg %p118
    // Predicated region
    $region9: #{tpu_custom_call.1} parent=5 // pred_check
      _
    $region10: #{tpu_custom_call.1} parent=5 // pred_check_branch
      %121 = sbr.rel (%p118) target = $region12
    $region11: #{tpu_custom_call.1} parent=5 // pred_region
      %s122 = ssub.s32 %s9, 1
      // Predicated region
      $region13: #{tpu_custom_call.1} parent=11 // pred_check
        %p123 = pneg %p82
      $region14: #{tpu_custom_call.1} parent=11 // pred_check_branch
        %125 = sbr.rel (%p123) target = $region16
      $region15: #{tpu_custom_call.1} parent=11 // pred_region
        _
      $region16: #{tpu_custom_call.1} parent=11 // pred_fallthru
        _
    $region12: #{tpu_custom_call.1} parent=5 // pred_fallthru
      _
    %p126 = scmp.lt.s32.totalorder %s9, 2
    // Predicated region
    $region17: #{tpu_custom_call.1} parent=5 // pred_check
      %p127 = pneg %p126
    $region18: #{tpu_custom_call.1} parent=5 // pred_check_branch
      %129 = sbr.rel (%p127) target = $region20
    $region19: #{tpu_custom_call.1} parent=5 // pred_region
      // Predicated region
      $region21: #{tpu_custom_call.1} parent=19 // pred_check
        %p130 = pneg %p29
      $region22: #{tpu_custom_call.1} parent=19 // pred_check_branch
        %132 = sbr.rel (%p130) target = $region24
      $region23: #{tpu_custom_call.1} parent=19 // pred_region
        %p133 = scmp.lt.s32.totalorder %s9, 1
        %s134 = scalar_select %p133, %s9, 1
        %s135 = smul.addr %s134, 8
        %s136 = scalar_lea.vmem %s0, %s135
      $region24: #{tpu_custom_call.1} parent=19 // pred_fallthru
        _
      // Predicated region
      $region25: #{tpu_custom_call.1} parent=19 // pred_check
        %p137 = pneg %p55
      $region26: #{tpu_custom_call.1} parent=19 // pred_check_branch
        %139 = sbr.rel (%p137) target = $region28
      $region27: #{tpu_custom_call.1} parent=19 // pred_region
        %p140 = scmp.lt.s32.totalorder %s9, 1
        %s141 = scalar_select %p140, %s9, 1
        %s142 = scalar_lea.vmem %s1, %s141
      $region28: #{tpu_custom_call.1} parent=19 // pred_fallthru
        _
    $region20: #{tpu_custom_call.1} parent=5 // pred_fallthru
      _
    %p143 = scmp.le.s32.totalorder 1, %s9
    %p144 = scmp.lt.s32.totalorder %s9, 3
    %p145 = pnand %p143, %p144
    %p146 = pneg %p145
    // Predicated region
    $region29: #{tpu_custom_call.1} parent=5 // pred_check
      _
    $region30: #{tpu_custom_call.1} parent=5 // pred_check_branch
      %148 = sbr.rel (%p145) target = $region32
    $region31: #{tpu_custom_call.1} parent=5 // pred_region
      %s149 = ssub.s32 %s9, 1
      %p150 = scmp.lt.s32.totalorder %s14, 1
      %s151 = scalar_select %p150, %s14, 1
      %s152 = smul.addr %s151, 8
      %s153 = scalar_lea.vmem %s0, %s152
      %p154 = pneg %p35
      %p155 = pneg %p32
      %p156 = scmp.lt.s32.totalorder %s14, 1
      %s157 = scalar_select %p156, %s14, 1
      %s158 = scalar_lea.vmem %s1, %s157
      %p159 = pneg %p61
      %p160 = pneg %p58
      %p161 = pneg %p82
      %p162 = pneg %p79
      %p163 = pneg %p108
      %p164 = pneg %p105
      %p165 = scmp.lt.s32.totalorder %s14, 1
      %s166 = scalar_select %p165, %s14, 1
      %s167 = smul.addr %s166, 4
      %s168 = smul.addr %s167, 8
      %s169 = scalar_lea.vmem %s3, %s168
      %p170 = scmp.lt.s32.totalorder %s14, 1
      %s171 = scalar_select %p170, %s14, 1
      %s172 = smul.addr %s171, 8
      %s173 = scalar_lea.vmem %s0, %s172
      %p174 = scmp.lt.s32.totalorder %s14, 1
      %s175 = scalar_select %p174, %s14, 1
      %s176 = scalar_lea.vmem %s1, %s175
      %p177 = scmp.lt.s32.totalorder %s14, 1
      %s178 = scalar_select %p177, %s14, 1
      %s179 = smul.addr %s178, 4
      %s180 = smul.addr %s179, 8
      %s181 = scalar_lea.vmem %s3, %s180
      %v182 = vld [vmem:[%s173] sm:$0x1f]
      %v183 = vld [vmem:[%s176] sm:$0x1]
      %v184 = vld [vmem:[%s2] sm:$0xff]
      %v185 = vld [vmem:[%s2 + $0x8] sm:$0xff]
      %v186 = vld [vmem:[%s2 + $0x10] sm:$0xff]
      %v187 = vld [vmem:[%s2 + $0x18] sm:$0x3]
      %v188 = vcvt.f32.s32.to.zero.pseudo %v182
      %v189 = vand.u32 2147483647, %v182
      %v190 = vmul.f32 %v189, 0.0055555557
      %vm191 = vcmp.ge.f32.partialorder %v182, -90.0
      %v192 = vsub.f32 90.0, %v182
      %v193 = vand.u32 2147483647, %v192
      %v194 = vadd.f32 %v182, 180.0
      %v195 = vand.u32 2147483647, %v194
      %v196 = vadd.f32 %v195, 90.0
      %v197 = vsel %vm191, %v193, %v196
      %v198 = vmul.f32 %v197, 0.0055555557
      %v199 = vcvt.f32.s32.to.zero.pseudo %v183
      %v200 = vlaneseq
      %v201 = vshrl.u32 %v200, 7
      %v202 = vlaneseq
      %v203 = vshrl.u32 %v202, 7
      %v204 = vsub.s32 0, %v203
      %v205 = vrot.slane %v199, %v204
      %vm206 = vcmp.eq.s32.totalorder %v205, %v201
      %v207 = vsel %vm206, 1, 0
      %v208 = vcvt.s32.f32 %v207
      %209 = vadd.xlane.f32.xlu0 %v208
      %v210 = vpop.xlane.xlu0 %209
      %v211 = vlaneseq
      %v212 = vand.u32 %v211, 127
      %vm213 = vcmp.eq.s32.totalorder %v212, 7
      %v215 = vlaneseq
      %v216 = vshrl.u32 %v215, 7
      %v217 = vsub.s32 %v212, %v216
      %v218 = vrot.slane %v210, %v217
      %v220 = vsel %vm213, 0.0, %v218
      %vm221 = vcmp.gt.f32.partialorder %v220, 0.0
      %v222 = vsel %vm221, 1, 0
      %v223 = vcvt.s32.f32 %v222
      %v225 = vrot.slane %v182, 1
      %v228 = vrot.slane %v190, 1
      %v231 = vrot.slane %v220, 4
      %v234 = vrot.slane %v223, 3
      %vm236 = vcmask 1040384
      %v237 = vsel %vm236, %v225, %v228
      %vm238 = vcmask 1041408
      %v239 = vsel %vm238, %v237, %v198
      %vm240 = vcmask 1042432
      %v241 = vsel %vm240, %v239, %v182
      %vm242 = vcmask 1043456
      %v243 = vsel %vm242, %v241, %v231
      %vm244 = vcmask 1044480
      %v245 = vsel %vm244, %v243, %v234
      %vm246 = vcmp.eq.s32.totalorder %v188, 0
      %v247 = vsel %vm246, 1, 0
      %v248 = vlaneseq
      %v249 = vshrl.u32 %v248, 7
      %v250 = vsub.s32 4, %v249
      %v251 = vrot.slane %v247, %v250
      %vm252 = vcmp.eq.s32.totalorder %v251, 1
      %254 = vset.pattern.permute.xlu0 0
      %255 = vperm.xlu0 %254, %v184
      %v256 = vpop.permute.xlu0 %255
      %259 = vset.pattern.permute.xlu0 0
      %260 = vperm.xlu0 %259, %v185
      %v261 = vpop.permute.xlu0 %260
      %264 = vset.pattern.permute.xlu0 0
      %265 = vperm.xlu0 %264, %v186
      %v266 = vpop.permute.xlu0 %265
      %269 = vset.pattern.permute.xlu0 0
      %270 = vperm.xlu0 %269, %v187
      %v271 = vpop.permute.xlu0 %270
      %v273 = vsel %vm252, %v256, 0.0
      %v274 = vsel %vm252, %v261, 0.0
      %v275 = vsel %vm252, %v266, 0.0
      %v276 = vsel %vm252, %v271, 0.0
      %v277 = vadd.f32 %v273, 0.0
      %v278 = vadd.f32 %v274, 0.0
      %v279 = vadd.f32 %v275, 0.0
      %v280 = vadd.f32 %v276, 0.0
      %vm281 = vcmp.eq.s32.totalorder %v188, 1
      %v282 = vsel %vm281, 1, 0
      %v283 = vlaneseq
      %v284 = vshrl.u32 %v283, 7
      %v285 = vsub.s32 4, %v284
      %v286 = vrot.slane %v282, %v285
      %vm287 = vcmp.eq.s32.totalorder %v286, 1
      %288 = vset.pattern.permute.xlu0 1
      %289 = vperm.xlu0 %288, %v184
      %v290 = vpop.permute.xlu0 %289
      %292 = vset.pattern.permute.xlu0 1
      %293 = vperm.xlu0 %292, %v185
      %v294 = vpop.permute.xlu0 %293
      %296 = vset.pattern.permute.xlu0 1
      %297 = vperm.xlu0 %296, %v186
      %v298 = vpop.permute.xlu0 %297
      %300 = vset.pattern.permute.xlu0 1
      %301 = vperm.xlu0 %300, %v187
      %v302 = vpop.permute.xlu0 %301
      %v304 = vsel %vm287, %v290, 0.0
      %v305 = vsel %vm287, %v294, 0.0
      %v306 = vsel %vm287, %v298, 0.0
      %v307 = vsel %vm287, %v302, 0.0
      %v308 = vadd.f32 %v277, %v304
      %v309 = vadd.f32 %v278, %v305
      %v310 = vadd.f32 %v279, %v306
      %v311 = vadd.f32 %v280, %v307
      %vm312 = vcmp.eq.s32.totalorder %v188, 2
      %v313 = vsel %vm312, 1, 0
      %v314 = vlaneseq
      %v315 = vshrl.u32 %v314, 7
      %v316 = vsub.s32 4, %v315
      %v317 = vrot.slane %v313, %v316
      %vm318 = vcmp.eq.s32.totalorder %v317, 1
      %319 = vset.pattern.permute.xlu0 2
      %320 = vperm.xlu0 %319, %v184
      %v321 = vpop.permute.xlu0 %320
      %323 = vset.pattern.permute.xlu0 2
      %324 = vperm.xlu0 %323, %v185
      %v325 = vpop.permute.xlu0 %324
      %327 = vset.pattern.permute.xlu0 2
      %328 = vperm.xlu0 %327, %v186
      %v329 = vpop.permute.xlu0 %328
      %331 = vset.pattern.permute.xlu0 2
      %332 = vperm.xlu0 %331, %v187
      %v333 = vpop.permute.xlu0 %332
      %v335 = vsel %vm318, %v321, 0.0
      %v336 = vsel %vm318, %v325, 0.0
      %v337 = vsel %vm318, %v329, 0.0
      %v338 = vsel %vm318, %v333, 0.0
      %v339 = vadd.f32 %v308, %v335
      %v340 = vadd.f32 %v309, %v336
      %v341 = vadd.f32 %v310, %v337
      %v342 = vadd.f32 %v311, %v338
      %vm343 = vcmp.eq.s32.totalorder %v188, 3
      %v344 = vsel %vm343, 1, 0
      %v345 = vlaneseq
      %v346 = vshrl.u32 %v345, 7
      %v347 = vsub.s32 4, %v346
      %v348 = vrot.slane %v344, %v347
      %vm349 = vcmp.eq.s32.totalorder %v348, 1
      %350 = vset.pattern.permute.xlu0 3
      %351 = vperm.xlu0 %350, %v184
      %v352 = vpop.permute.xlu0 %351
      %354 = vset.pattern.permute.xlu0 3
      %355 = vperm.xlu0 %354, %v185
      %v356 = vpop.permute.xlu0 %355
      %358 = vset.pattern.permute.xlu0 3
      %359 = vperm.xlu0 %358, %v186
      %v360 = vpop.permute.xlu0 %359
      %362 = vset.pattern.permute.xlu0 3
      %363 = vperm.xlu0 %362, %v187
      %v364 = vpop.permute.xlu0 %363
      %v366 = vsel %vm349, %v352, 0.0
      %v367 = vsel %vm349, %v356, 0.0
      %v368 = vsel %vm349, %v360, 0.0
      %v369 = vsel %vm349, %v364, 0.0
      %v370 = vadd.f32 %v339, %v366
      %v371 = vadd.f32 %v340, %v367
      %v372 = vadd.f32 %v341, %v368
      %v373 = vadd.f32 %v342, %v369
      %vm374 = vcmp.eq.s32.totalorder %v188, 4
      %v375 = vsel %vm374, 1, 0
      %v376 = vlaneseq
      %v377 = vshrl.u32 %v376, 7
      %v378 = vsub.s32 4, %v377
      %v379 = vrot.slane %v375, %v378
      %vm380 = vcmp.eq.s32.totalorder %v379, 1
      %381 = vset.pattern.permute.xlu0 4
      %382 = vperm.xlu0 %381, %v184
      %v383 = vpop.permute.xlu0 %382
      %385 = vset.pattern.permute.xlu0 4
      %386 = vperm.xlu0 %385, %v185
      %v387 = vpop.permute.xlu0 %386
      %389 = vset.pattern.permute.xlu0 4
      %390 = vperm.xlu0 %389, %v186
      %v391 = vpop.permute.xlu0 %390
      %393 = vset.pattern.permute.xlu0 4
      %394 = vperm.xlu0 %393, %v187
      %v395 = vpop.permute.xlu0 %394
      %v397 = vsel %vm380, %v383, 0.0
      %v398 = vsel %vm380, %v387, 0.0
      %v399 = vsel %vm380, %v391, 0.0
      %v400 = vsel %vm380, %v395, 0.0
      %v401 = vadd.f32 %v370, %v397
      %v402 = vadd.f32 %v371, %v398
      %v403 = vadd.f32 %v372, %v399
      %v404 = vadd.f32 %v373, %v400
      %vm405 = vcmp.eq.s32.totalorder %v188, 5
      %v406 = vsel %vm405, 1, 0
      %v407 = vlaneseq
      %v408 = vshrl.u32 %v407, 7
      %v409 = vsub.s32 4, %v408
      %v410 = vrot.slane %v406, %v409
      %vm411 = vcmp.eq.s32.totalorder %v410, 1
      %412 = vset.pattern.permute.xlu0 5
      %413 = vperm.xlu0 %412, %v184
      %v414 = vpop.permute.xlu0 %413
      %416 = vset.pattern.permute.xlu0 5
      %417 = vperm.xlu0 %416, %v185
      %v418 = vpop.permute.xlu0 %417
      %420 = vset.pattern.permute.xlu0 5
      %421 = vperm.xlu0 %420, %v186
      %v422 = vpop.permute.xlu0 %421
      %424 = vset.pattern.permute.xlu0 5
      %425 = vperm.xlu0 %424, %v187
      %v426 = vpop.permute.xlu0 %425
      %v428 = vsel %vm411, %v414, 0.0
      %v429 = vsel %vm411, %v418, 0.0
      %v430 = vsel %vm411, %v422, 0.0
      %v431 = vsel %vm411, %v426, 0.0
      %v432 = vadd.f32 %v401, %v428
      %v433 = vadd.f32 %v402, %v429
      %v434 = vadd.f32 %v403, %v430
      %v435 = vadd.f32 %v404, %v431
      %vm436 = vcmp.eq.s32.totalorder %v188, 6
      %v437 = vsel %vm436, 1, 0
      %v438 = vlaneseq
      %v439 = vshrl.u32 %v438, 7
      %v440 = vsub.s32 4, %v439
      %v441 = vrot.slane %v437, %v440
      %vm442 = vcmp.eq.s32.totalorder %v441, 1
      %443 = vset.pattern.permute.xlu0 6
      %444 = vperm.xlu0 %443, %v184
      %v445 = vpop.permute.xlu0 %444
      %447 = vset.pattern.permute.xlu0 6
      %448 = vperm.xlu0 %447, %v185
      %v449 = vpop.permute.xlu0 %448
      %451 = vset.pattern.permute.xlu0 6
      %452 = vperm.xlu0 %451, %v186
      %v453 = vpop.permute.xlu0 %452
      %455 = vset.pattern.permute.xlu0 6
      %456 = vperm.xlu0 %455, %v187
      %v457 = vpop.permute.xlu0 %456
      %v459 = vsel %vm442, %v445, 0.0
      %v460 = vsel %vm442, %v449, 0.0
      %v461 = vsel %vm442, %v453, 0.0
      %v462 = vsel %vm442, %v457, 0.0
      %v463 = vadd.f32 %v432, %v459
      %v464 = vadd.f32 %v433, %v460
      %v465 = vadd.f32 %v434, %v461
      %v466 = vadd.f32 %v435, %v462
      %vm471 = vcmask 1045504
      %v472 = vrot.slane %v463, 2
      %v473 = vrot.slane %v464, 2
      %v474 = vsel %vm471, %v472, %v473
      %v475 = vrot.slane %v465, 2
      %v476 = vsel %vm471, %v473, %v475
      %v477 = vrot.slane %v466, 2
      %v478 = vsel %vm471, %v475, %v477
      %v483 = vsel %vm471, %v245, %v472
      %vm484 = vcmask 64512
      %485 = vst.msk [vmem:[%s181] sm:$0xff] %vm484, %v483
      %486 = vst.msk [vmem:[%s181 + $0x8] sm:$0xff] %vm484, %v474
      %487 = vst.msk [vmem:[%s181 + $0x10] sm:$0xff] %vm484, %v476
      %488 = vst.msk [vmem:[%s181 + $0x18] sm:$0xff] %vm484, %v478
      %p489 = scmp.lt.s32.totalorder %s14, 1
      %s490 = scalar_select %p489, %s14, 1
      %s491 = smul.addr %s490, 4
      %s492 = smul.addr %s491, 8
      %s493 = scalar_lea.vmem %s3, %s492
      // Predicated region
      $region33: #{tpu_custom_call.1} parent=31 // pred_check
        %p494 = pneg %p105
      $region34: #{tpu_custom_call.1} parent=31 // pred_check_branch
        %496 = sbr.rel (%p494) target = $region36
      $region35: #{tpu_custom_call.1} parent=31 // pred_region
        _
      $region36: #{tpu_custom_call.1} parent=31 // pred_fallthru
        _
    $region32: #{tpu_custom_call.1} parent=5 // pred_fallthru
      _
    %p497 = scmp.le.s32.totalorder 2, %s9
    // Predicated region
    $region37: #{tpu_custom_call.1} parent=5 // pred_check
      %p498 = pneg %p497
    $region38: #{tpu_custom_call.1} parent=5 // pred_check_branch
      %500 = sbr.rel (%p498) target = $region40
    $region39: #{tpu_custom_call.1} parent=5 // pred_region
      %s501 = ssub.s32 %s9, 2
      // Predicated region
      $region41: #{tpu_custom_call.1} parent=39 // pred_check
        %p502 = pneg %p111
      $region42: #{tpu_custom_call.1} parent=39 // pred_check_branch
        %504 = sbr.rel (%p502) target = $region44
      $region43: #{tpu_custom_call.1} parent=39 // pred_region
        %p505 = scmp.lt.s32.totalorder %s15, 1
        %s506 = scalar_select %p505, %s15, 1
        %s507 = smul.addr %s506, 4
        %s508 = smul.addr %s507, 8
        %s509 = scalar_lea.vmem %s3, %s508
      $region44: #{tpu_custom_call.1} parent=39 // pred_fallthru
        _
    $region40: #{tpu_custom_call.1} parent=5 // pred_fallthru
      _
  $region6: #{tpu_custom_call.1} parent=0 // loop_footer
    %s13 = sadd.s32 1, %s9
  $region7: #{tpu_custom_call.1} parent=0 // loop_footer_branch
    %8 = sbr.rel target = $region3
  $region8: #{tpu_custom_call.1} parent=0 // loop_exit
    _

</llo_original>
